<compile_context>
chip_gen: v7x
topology: tpu7x:2x2x1
jax: 0.10.0
libtpu: 0.0.40
codegen_flags: <defaults>
</compile_context>

<pallas_src>
import jax
import jax.numpy as jnp
from jax.experimental import pallas as pl
from jax.experimental.pallas import tpu as pltpu


def _round_up(n, m):
    return ((n + m - 1) // m) * m


def time_mixing_kernel(x_ref, gamma_ref, beta_ref, w1g_ref, b1g_ref, w2_ref,
                       b2_ref, o_ref):
    # ---- LayerNorm (f32, biased variance, eps = 1e-5, matches nn.LayerNorm) ----
    x = x_ref[...].astype(jnp.float32)                        # (TM, H)
    mean = jnp.mean(x, axis=-1, keepdims=True)
    xc = x - mean
    var = jnp.mean(xc * xc, axis=-1, keepdims=True)
    xn = xc * jax.lax.rsqrt(var + 1e-5)
    xn = xn * gamma_ref[...] + beta_ref[...]                  # (TM, H) f32

    # ---- fused hidden+gate projection: single bf16 MXU matmul, f32 accumulate ----
    z = jnp.dot(xn.astype(jnp.bfloat16), w1g_ref[...],
                preferred_element_type=jnp.float32) + b1g_ref[...]   # (TM, 4H) f32
    two_h = w2_ref.shape[1]
    h = jnp.maximum(z[:, :two_h], 0.0)                        # relu(mlp1(xn))
    g = jax.nn.sigmoid(z[:, two_h:])                          # sigmoid(gate(xn))
    hg = h * g                                                # (TM, 2H) f32

    # ---- rank-1 projection on VPU multiply + XLU lane-reduce (keeps MXU free) ----
    out = jnp.sum(hg * w2_ref[...], axis=-1, keepdims=True) + b2_ref[0, 0]
    o_ref[...] = out.astype(o_ref.dtype)                      # (TM, 1)


def time_mixing(x, params, *, tm=256):
    """x: (B, T, H) float32 -> (B, T, 1) float32."""
    B, T, H = x.shape
    rows = B * T
    gamma, beta, w1, b1, wg, bg, w2, b2 = params

    # ---- wrapper-side weight packing (done once, outside the hot loop) ----
    w1g = jnp.concatenate([w1, wg], axis=1).astype(jnp.bfloat16)      # (H, 4H)
    b1g = jnp.concatenate([b1, bg]).reshape(1, 4 * H).astype(jnp.float32)
    gamma2 = gamma.reshape(1, H).astype(jnp.float32)
    beta2 = beta.reshape(1, H).astype(jnp.float32)
    w2r = w2.reshape(1, 2 * H).astype(jnp.float32)
    b2s = b2.reshape(1, 1).astype(jnp.float32)

    # ---- row tiling: TM a multiple of 8; pad the tail so all blocks are full ----
    tm = min(tm, _round_up(rows, 8))
    rows_p = _round_up(rows, tm)
    x2d = x.reshape(rows, H)
    if rows_p != rows:
        x2d = jnp.pad(x2d, ((0, rows_p - rows), (0, 0)))
    num_tiles = rows_p // tm

    # ---- VMEM budget (generation-aware: stay within v7x's 64 MiB physical) ----
    lane = 128
    x_tile_b = tm * _round_up(H, lane) * 4
    o_tile_b = tm * lane * 4
    wgt_b = (H * _round_up(4 * H, lane) * 2          # fused bf16 weight
             + 8 * _round_up(4 * H, lane) * 4)       # f32 biases / gamma / beta / w2
    needed = 3 * (x_tile_b + o_tile_b) + 2 * wgt_b + (8 << 20)
    vmem_limit = int(max(32 << 20, min(48 << 20, needed)))

    # ---- advisory cost estimate for XLA scheduling around the custom call ----
    flops = int(rows_p * (2 * H * 4 * H + 4 * (2 * H) + 10 * H))
    transcendentals = int(rows_p * (2 * H + 1))
    bytes_accessed = int(rows_p * H * 4 + rows_p * 4
                         + H * 4 * H * 2 + 4 * H * 4 + 2 * H * 4 + 2 * H * 4 + 4)

    out2d = pl.pallas_call(
        time_mixing_kernel,
        out_shape=jax.ShapeDtypeStruct((rows_p, 1), x.dtype),
        grid=(num_tiles,),
        in_specs=[
            pl.BlockSpec((tm, H), lambda i: (i, 0)),            # x tile (pipelined)
            pl.BlockSpec((1, H), lambda i: (0, 0)),             # gamma (resident)
            pl.BlockSpec((1, H), lambda i: (0, 0)),             # beta  (resident)
            pl.BlockSpec((H, 4 * H), lambda i: (0, 0)),         # fused W1|Wg bf16
            pl.BlockSpec((1, 4 * H), lambda i: (0, 0)),         # fused b1|bg
            pl.BlockSpec((1, 2 * H), lambda i: (0, 0)),         # w2 row
            pl.BlockSpec((1, 1), lambda i: (0, 0),
                         memory_space=pltpu.MemorySpace.SMEM),  # b2 scalar
        ],
        out_specs=pl.BlockSpec((tm, 1), lambda i: (i, 0)),
        compiler_params=pltpu.CompilerParams(
            dimension_semantics=("parallel",),
            vmem_limit_bytes=vmem_limit),
        cost_estimate=pl.CostEstimate(
            flops=flops, transcendentals=transcendentals,
            bytes_accessed=bytes_accessed),
    )(x2d, gamma2, beta2, w1g, b1g, w2r, b2s)

    return out2d[:rows].reshape(B, T, 1)


def init_params(key, hidden_dim):
    H = hidden_dim
    ks = jax.random.split(key, 6)
    # Deterministic synthetic init (roughly PyTorch-Linear-like scale).
    gamma = jnp.ones((H,), jnp.float32)
    beta = jnp.zeros((H,), jnp.float32)
    w1 = jax.random.uniform(ks[0], (H, 2 * H), jnp.float32, -1.0, 1.0) / jnp.sqrt(H)
    b1 = jax.random.uniform(ks[1], (2 * H,), jnp.float32, -1.0, 1.0) / jnp.sqrt(H)
    wg = jax.random.uniform(ks[2], (H, 2 * H), jnp.float32, -1.0, 1.0) / jnp.sqrt(H)
    bg = jax.random.uniform(ks[3], (2 * H,), jnp.float32, -1.0, 1.0) / jnp.sqrt(H)
    w2 = jax.random.uniform(ks[4], (2 * H, 1), jnp.float32, -1.0, 1.0) / jnp.sqrt(2 * H)
    b2 = jax.random.uniform(ks[5], (1,), jnp.float32, -1.0, 1.0) / jnp.sqrt(2 * H)
    return (gamma, beta, w1, b1, wg, bg, w2, b2)


def time_mixing_ref(x, params):
    """Pure-JAX f32 reference matching the PyTorch module."""
    gamma, beta, w1, b1, wg, bg, w2, b2 = params
    mean = jnp.mean(x, axis=-1, keepdims=True)
    var = jnp.mean((x - mean) ** 2, axis=-1, keepdims=True)
    xn = (x - mean) / jnp.sqrt(var + 1e-5) * gamma + beta
    gate = jax.nn.sigmoid(xn @ wg + bg)
    h = jnp.maximum(xn @ w1 + b1, 0.0)
    return (h * gate) @ w2 + b2


if __name__ == "__main__":
    key = jax.random.PRNGKey(0)
    k_x, k_p = jax.random.split(key)

    # H = 64 keeps the fused (H,4H) result's h/gate split 128-lane aligned.
    B, T, H = 2, 8, 64
    x = jax.random.normal(k_x, (B, T, H), jnp.float32)
    params = init_params(k_p, H)

    out = jax.block_until_ready(time_mixing(x, params))
    ref = time_mixing_ref(x, params)

    assert out.shape == (B, T, 1)
    max_err = float(jnp.max(jnp.abs(out - ref)))
    # bf16 MXU operands (f32 accumulate) loosen the tolerance vs the f32 reference.
    assert jnp.allclose(out, ref, atol=2e-2, rtol=2e-2), f"max_abs_err={max_err}"

    print("KERNEL_OK")
</pallas_src>

<mosaic_0001>
module attributes {stable_mosaic.version = 11 : i64} {
  func.func @time_mixing_kernel(%arg0: i32, %arg1: memref<16x64xf32, #tpu.memory_space<vmem>>, %arg2: memref<1x64xf32, #tpu.memory_space<vmem>>, %arg3: memref<1x64xf32, #tpu.memory_space<vmem>>, %arg4: memref<64x256xbf16, #tpu.memory_space<vmem>>, %arg5: memref<1x256xf32, #tpu.memory_space<vmem>>, %arg6: memref<1x128xf32, #tpu.memory_space<vmem>>, %arg7: memref<1x1xf32, #tpu.memory_space<smem>>, %arg8: memref<16x1xf32, #tpu.memory_space<vmem>>) attributes {dimension_semantics = [#tpu.dimension_semantics<parallel>], iteration_bounds = array<i64: 1>, scalar_prefetch = 0 : i64, scratch_operands = 0 : i64, tpu.core_type = #tpu.core_type<tc>, window_params = [{transform_indices = @transform_0, window_bounds = array<i64: 16, 64>}, {pipeline_mode = #tpu.pipeline_mode<synchronous>, transform_indices = @transform_1, window_bounds = array<i64: 1, 64>}, {pipeline_mode = #tpu.pipeline_mode<synchronous>, transform_indices = @transform_2, window_bounds = array<i64: 1, 64>}, {pipeline_mode = #tpu.pipeline_mode<synchronous>, transform_indices = @transform_3, window_bounds = array<i64: 64, 256>}, {pipeline_mode = #tpu.pipeline_mode<synchronous>, transform_indices = @transform_4, window_bounds = array<i64: 1, 256>}, {pipeline_mode = #tpu.pipeline_mode<synchronous>, transform_indices = @transform_5, window_bounds = array<i64: 1, 128>}, {transform_indices = @transform_6, window_bounds = array<i64: 1, 1>}, {transform_indices = @transform_7, window_bounds = array<i64: 16, 1>}]} {
    %c0 = arith.constant 0 : index
    %c0_0 = arith.constant 0 : index
    %0 = vector.load %arg1[%c0, %c0_0] : memref<16x64xf32, #tpu.memory_space<vmem>>, vector<16x64xf32>
    %cst = arith.constant dense<0.000000e+00> : vector<16xf32>
    %1 = vector.multi_reduction <add>, %0, %cst [1] : vector<16x64xf32> to vector<16xf32>
    %2 = vector.shape_cast %1 : vector<16xf32> to vector<16x1xf32>
    %cst_1 = arith.constant 6.400000e+01 : f32
    %3 = vector.broadcast %cst_1 : f32 to vector<16x1xf32>
    %4 = arith.divf %2, %3 : vector<16x1xf32>
    %5 = vector.broadcast %4 : vector<16x1xf32> to vector<16x64xf32>
    %6 = arith.subf %0, %5 : vector<16x64xf32>
    %7 = arith.mulf %6, %6 : vector<16x64xf32>
    %cst_2 = arith.constant dense<0.000000e+00> : vector<16xf32>
    %8 = vector.multi_reduction <add>, %7, %cst_2 [1] : vector<16x64xf32> to vector<16xf32>
    %9 = vector.shape_cast %8 : vector<16xf32> to vector<16x1xf32>
    %cst_3 = arith.constant 6.400000e+01 : f32
    %10 = vector.broadcast %cst_3 : f32 to vector<16x1xf32>
    %11 = arith.divf %9, %10 : vector<16x1xf32>
    %cst_4 = arith.constant 9.99999974E-6 : f32
    %12 = vector.broadcast %cst_4 : f32 to vector<16x1xf32>
    %13 = arith.addf %11, %12 : vector<16x1xf32>
    %14 = math.rsqrt %13 : vector<16x1xf32>
    %15 = vector.broadcast %14 : vector<16x1xf32> to vector<16x64xf32>
    %16 = arith.mulf %6, %15 : vector<16x64xf32>
    %c0_5 = arith.constant 0 : index
    %c0_6 = arith.constant 0 : index
    %17 = vector.load %arg2[%c0_5, %c0_6] : memref<1x64xf32, #tpu.memory_space<vmem>>, vector<1x64xf32>
    %18 = vector.broadcast %17 : vector<1x64xf32> to vector<16x64xf32>
    %19 = arith.mulf %16, %18 : vector<16x64xf32>
    %c0_7 = arith.constant 0 : index
    %c0_8 = arith.constant 0 : index
    %20 = vector.load %arg3[%c0_7, %c0_8] : memref<1x64xf32, #tpu.memory_space<vmem>>, vector<1x64xf32>
    %21 = vector.broadcast %20 : vector<1x64xf32> to vector<16x64xf32>
    %22 = arith.addf %19, %21 : vector<16x64xf32>
    %23 = arith.truncf %22 : vector<16x64xf32> to vector<16x64xbf16>
    %c0_9 = arith.constant 0 : index
    %c0_10 = arith.constant 0 : index
    %24 = vector.load %arg4[%c0_9, %c0_10] : memref<64x256xbf16, #tpu.memory_space<vmem>>, vector<64x256xbf16>
    %cst_11 = arith.constant dense<0.000000e+00> : vector<16x256xf32>
    %25 = tpu.matmul %23, %24, %cst_11 {dimension_numbers = #tpu.dot_dimension_numbers<[1], [0], [0], [1], [0, 0, 1, 1], [], []>} : vector<16x64xbf16>, vector<64x256xbf16>, vector<16x256xf32> -> vector<16x256xf32>
    %c0_12 = arith.constant 0 : index
    %c0_13 = arith.constant 0 : index
    %26 = vector.load %arg5[%c0_12, %c0_13] : memref<1x256xf32, #tpu.memory_space<vmem>>, vector<1x256xf32>
    %27 = vector.broadcast %26 : vector<1x256xf32> to vector<16x256xf32>
    %28 = arith.addf %25, %27 : vector<16x256xf32>
    %29 = vector.extract_strided_slice %28 {offsets = [0, 0], sizes = [16, 128], strides = [1, 1]} : vector<16x256xf32> to vector<16x128xf32>
    %cst_14 = arith.constant 0.000000e+00 : f32
    %30 = vector.broadcast %cst_14 : f32 to vector<16x128xf32>
    %31 = arith.maximumf %29, %30 : vector<16x128xf32>
    %32 = vector.extract_strided_slice %28 {offsets = [0, 128], sizes = [16, 128], strides = [1, 1]} : vector<16x256xf32> to vector<16x128xf32>
    %33 = arith.negf %32 : vector<16x128xf32>
    %34 = math.exp %33 : vector<16x128xf32>
    %cst_15 = arith.constant 1.000000e+00 : f32
    %35 = vector.broadcast %cst_15 : f32 to vector<16x128xf32>
    %36 = arith.addf %35, %34 : vector<16x128xf32>
    %37 = arith.divf %35, %36 : vector<16x128xf32>
    %38 = arith.mulf %31, %37 : vector<16x128xf32>
    %c0_16 = arith.constant 0 : index
    %c0_17 = arith.constant 0 : index
    %39 = vector.load %arg6[%c0_16, %c0_17] : memref<1x128xf32, #tpu.memory_space<vmem>>, vector<1x128xf32>
    %40 = vector.broadcast %39 : vector<1x128xf32> to vector<16x128xf32>
    %41 = arith.mulf %38, %40 : vector<16x128xf32>
    %cst_18 = arith.constant dense<0.000000e+00> : vector<16xf32>
    %42 = vector.multi_reduction <add>, %41, %cst_18 [1] : vector<16x128xf32> to vector<16xf32>
    %43 = vector.shape_cast %42 : vector<16xf32> to vector<16x1xf32>
    %c0_19 = arith.constant 0 : index
    %c0_20 = arith.constant 0 : index
    %44 = memref.load %arg7[%c0_19, %c0_20] : memref<1x1xf32, #tpu.memory_space<smem>>
    %45 = vector.broadcast %44 : f32 to vector<16x1xf32>
    %46 = arith.addf %43, %45 : vector<16x1xf32>
    %c0_21 = arith.constant 0 : index
    %c0_22 = arith.constant 0 : index
    %47 = vector.load %arg8[%c0_21, %c0_22] : memref<16x1xf32, #tpu.memory_space<vmem>>, vector<16x1xf32>
    tpu.vector_store %arg8[%c0_21, %c0_22], %46 {strides = array<i32>} : memref<16x1xf32, #tpu.memory_space<vmem>>, vector<16x1xf32>,
    return
  }
  func.func @transform_0(%arg0: i32) -> (i32, i32) {
    %c0_i32 = arith.constant 0 : i32
    %c0_i32_0 = arith.constant 0 : i32
    return %arg0, %c0_i32 : i32, i32
  }
  func.func @transform_1(%arg0: i32) -> (i32, i32) {
    %c0_i32 = arith.constant 0 : i32
    %c0_i32_0 = arith.constant 0 : i32
    %c0_i32_1 = arith.constant 0 : i32
    return %c0_i32, %c0_i32_0 : i32, i32
  }
  func.func @transform_2(%arg0: i32) -> (i32, i32) {
    %c0_i32 = arith.constant 0 : i32
    %c0_i32_0 = arith.constant 0 : i32
    %c0_i32_1 = arith.constant 0 : i32
    return %c0_i32, %c0_i32_0 : i32, i32
  }
  func.func @transform_3(%arg0: i32) -> (i32, i32) {
    %c0_i32 = arith.constant 0 : i32
    %c0_i32_0 = arith.constant 0 : i32
    %c0_i32_1 = arith.constant 0 : i32
    return %c0_i32, %c0_i32_0 : i32, i32
  }
  func.func @transform_4(%arg0: i32) -> (i32, i32) {
    %c0_i32 = arith.constant 0 : i32
    %c0_i32_0 = arith.constant 0 : i32
    %c0_i32_1 = arith.constant 0 : i32
    return %c0_i32, %c0_i32_0 : i32, i32
  }
  func.func @transform_5(%arg0: i32) -> (i32, i32) {
    %c0_i32 = arith.constant 0 : i32
    %c0_i32_0 = arith.constant 0 : i32
    %c0_i32_1 = arith.constant 0 : i32
    return %c0_i32, %c0_i32_0 : i32, i32
  }
  func.func @transform_6(%arg0: i32) -> (i32, i32) {
    %c0_i32 = arith.constant 0 : i32
    %c0_i32_0 = arith.constant 0 : i32
    %c0_i32_1 = arith.constant 0 : i32
    return %c0_i32, %c0_i32_0 : i32, i32
  }
  func.func @transform_7(%arg0: i32) -> (i32, i32) {
    %c0_i32 = arith.constant 0 : i32
    %c0_i32_0 = arith.constant 0 : i32
    return %arg0, %c0_i32 : i32, i32
  }
}

</mosaic_0001>

<llo_original>
// kernel: tpu_custom_call.1
$region0: #{tpu_custom_call.1}
  #allocation0 [shape = 'u32[]', space=smem, size = 0x4, offset = 0x4, fixed_abs, tag = 'smem constant byte address 0x4 - core index']
  #allocation1 [shape = 'u32[144,128]{1,0:T(1,128)}', space=vmem, size = 0x12000, scoped, tag = 'internal scratch']
  #allocation2 [shape = 'f32[1,1]{1,0:T(1,128)S(6)}', space=smem, size = 0x200, scoped, tag = 'scoped memory for tpu_custom_call.1']
  %s0 = inlined_call_operand.hbm [shape: f32[16,64], index: 0, kind: input, shape index: {}]
  %s1 = inlined_call_operand.vmem [shape: f32[1,64], index: 1, kind: input, shape index: {}]
  %s2 = inlined_call_operand.vmem [shape: f32[1,64], index: 2, kind: input, shape index: {}]
  %s3 = inlined_call_operand.hbm [shape: bf16[64,256], index: 3, kind: input, shape index: {}]
  %s4 = inlined_call_operand.vmem [shape: f32[1,256], index: 4, kind: input, shape index: {}]
  %s5 = inlined_call_operand.vmem [shape: f32[1,128], index: 5, kind: input, shape index: {}]
  %s6 = inlined_call_operand.<no memory space> [shape: f32[1,1], index: 6, kind: input, shape index: {}]
  %s7 = inlined_call_operand.vmem [shape: f32[16,1], index: 7, kind: output, shape index: {}]
  %s8 = sld [smem:[#allocation0]]
  $region46: #{tpu_custom_call.1} parent=0
    _
  %s10 = ssub.s32 1, %s8
  %s11 = scalar_select 0, %s10, %s8
  %12 = sst [smem:[#allocation2]] %s6
  $region1: #{tpu_custom_call.1} parent=0
    #allocation3 [shape = 'u8[8192]{0}', space=vmem, size = 0x2000, scoped, tag = 'input window, operand 0, single buffered']
    #allocation4 [shape = 's32[1]{0}', space=sflag, size = 0x4, scoped, tag = 'scoped memory for tpu_custom_call.1']
    #allocation5 [shape = 'u8[32768]{0}', space=vmem, size = 0x8000, scoped, tag = 'input window, operand 3, single buffered']
    #allocation6 [shape = 's32[1]{0}', space=sflag, size = 0x4, scoped, tag = 'scoped memory for tpu_custom_call.1']
    %13 = vsyncpa [#allocation4], 0
    %14 = vsyncpa [#allocation6], 0
    // Predicated region
    $region2: #{tpu_custom_call.1} parent=1 // pred_check
      _
    $region3: #{tpu_custom_call.1} parent=1 // pred_check_branch
      %16 = sbr.rel (0) target = $region5
    $region4: #{tpu_custom_call.1} parent=1 // pred_region
      %s18 = ssub.s32 256, 256
      %19 = vsyncadd [#allocation4], %s18
      %s20 = sshll.u32 [#allocation3], 4
      %s21 = int_to_ptr.vmem [resolvable:$true] %s20
      %26 = dma.hbm_to_vmem [thread:$0]  %s0, 256, %s21, [#allocation4], 128, 128, 8
    $region5: #{tpu_custom_call.1} parent=1 // pred_fallthru
      _
    // Predicated region
    $region6: #{tpu_custom_call.1} parent=1 // pred_check
      _
    $region7: #{tpu_custom_call.1} parent=1 // pred_check_branch
      %28 = sbr.rel (0) target = $region9
    $region8: #{tpu_custom_call.1} parent=1 // pred_region
      _
    $region9: #{tpu_custom_call.1} parent=1 // pred_fallthru
      _
    // Predicated region
    $region10: #{tpu_custom_call.1} parent=1 // pred_check
      _
    $region11: #{tpu_custom_call.1} parent=1 // pred_check_branch
      %30 = sbr.rel (0) target = $region13
    $region12: #{tpu_custom_call.1} parent=1 // pred_region
      _
    $region13: #{tpu_custom_call.1} parent=1 // pred_fallthru
      _
    // Predicated region
    $region14: #{tpu_custom_call.1} parent=1 // pred_check
      _
    $region15: #{tpu_custom_call.1} parent=1 // pred_check_branch
      %32 = sbr.rel (0) target = $region17
    $region16: #{tpu_custom_call.1} parent=1 // pred_region
      %s34 = ssub.s32 1024, 1024
      %35 = vsyncadd [#allocation6], %s34
      %s36 = sshll.u32 [#allocation5], 4
      %s37 = int_to_ptr.vmem [resolvable:$true] %s36
      %42 = dma.hbm_to_vmem [thread:$0]  %s3, 1024, %s37, [#allocation6], 128, 128, 8
    $region17: #{tpu_custom_call.1} parent=1 // pred_fallthru
      _
    // Predicated region
    $region18: #{tpu_custom_call.1} parent=1 // pred_check
      _
    $region19: #{tpu_custom_call.1} parent=1 // pred_check_branch
      %44 = sbr.rel (0) target = $region21
    $region20: #{tpu_custom_call.1} parent=1 // pred_region
      _
    $region21: #{tpu_custom_call.1} parent=1 // pred_fallthru
      _
    // Predicated region
    $region22: #{tpu_custom_call.1} parent=1 // pred_check
      _
    $region23: #{tpu_custom_call.1} parent=1 // pred_check_branch
      %46 = sbr.rel (0) target = $region25
    $region24: #{tpu_custom_call.1} parent=1 // pred_region
      _
    $region25: #{tpu_custom_call.1} parent=1 // pred_fallthru
      _
    // Predicated region
    $region26: #{tpu_custom_call.1} parent=1 // pred_check
      _
    $region27: #{tpu_custom_call.1} parent=1 // pred_check_branch
      %48 = sbr.rel (0) target = $region29
    $region28: #{tpu_custom_call.1} parent=1 // pred_region
      _
    $region29: #{tpu_custom_call.1} parent=1 // pred_fallthru
      _
    // Predicated region
    $region30: #{tpu_custom_call.1} parent=1 // pred_check
      _
    $region31: #{tpu_custom_call.1} parent=1 // pred_check_branch
      %50 = sbr.rel (0) target = $region33
    $region32: #{tpu_custom_call.1} parent=1 // pred_region
      %51 = dma.done [#allocation4], 256
    $region33: #{tpu_custom_call.1} parent=1 // pred_fallthru
      _
    // Predicated region
    $region34: #{tpu_custom_call.1} parent=1 // pred_check
      _
    $region35: #{tpu_custom_call.1} parent=1 // pred_check_branch
      %53 = sbr.rel (0) target = $region37
    $region36: #{tpu_custom_call.1} parent=1 // pred_region
      %54 = dma.done [#allocation6], 1024
    $region37: #{tpu_custom_call.1} parent=1 // pred_fallthru
      _
    %v56 = vld [vmem:[#allocation3] sm:$0xff]
    %v57 = vld [vmem:[#allocation3 + $0x8] sm:$0xff]
    %vm58 = vcmask 523264
    %v59 = vsel %vm58, %v56, 0.0
    %60 = vadd.xlane.f32.xlu0 %v59
    %v61 = vpop.xlane.xlu0 %60
    %v62 = vsel %vm58, %v57, 0.0
    %63 = vadd.xlane.f32.xlu0 %v62
    %v64 = vpop.xlane.xlu0 %63
    %v65 = vrcp.pop 64.0
    %v66 = vmul.f32 %v61, %v65
    %v67 = vmul.f32 %v64, %v65
    %v68 = vsub.f32 %v56, %v66
    %v69 = vsub.f32 %v57, %v67
    %v70 = vmul.f32 %v68, %v68
    %v71 = vmul.f32 %v69, %v69
    %v72 = vsel %vm58, %v70, 0.0
    %73 = vadd.xlane.f32.xlu0 %v72
    %v74 = vpop.xlane.xlu0 %73
    %v75 = vsel %vm58, %v71, 0.0
    %76 = vadd.xlane.f32.xlu0 %v75
    %v77 = vpop.xlane.xlu0 %76
    %v78 = vmul.f32 %v74, %v65
    %v79 = vmul.f32 %v77, %v65
    %v80 = vadd.f32 %v78, 1e-05
    %v81 = vadd.f32 %v79, 1e-05
    %v82 = vrsqrt.pop %v80
    %v83 = vrsqrt.pop %v81
    %v84 = vmul.f32 %v68, %v82
    %v85 = vmul.f32 %v69, %v83
    %v86 = vld [vmem:[%s1] sm:$0x1]
    %v88 = vlaneseq
    %v89 = vshrl.u32 %v88, 7
    %v90 = vsub.s32 0, %v89
    %v91 = vrot.slane %v86, %v90
    %v93 = vmul.f32 %v84, %v91
    %v94 = vmul.f32 %v85, %v91
    %v95 = vld [vmem:[%s2] sm:$0x1]
    %v97 = vlaneseq
    %v98 = vshrl.u32 %v97, 7
    %v99 = vsub.s32 0, %v98
    %v100 = vrot.slane %v95, %v99
    %v102 = vadd.f32 %v93, %v100
    %v103 = vadd.f32 %v94, %v100
    %v104 = vpack.c.bf16 %v103, %v102
    %v105 = vld [vmem:[#allocation5] sm:$0xff]
    %v106 = vld [vmem:[#allocation5 + $0x8] sm:$0xff]
    %v107 = vld [vmem:[#allocation5 + $0x10] sm:$0xff]
    %v108 = vld [vmem:[#allocation5 + $0x18] sm:$0xff]
    %v109 = vld [vmem:[#allocation5 + $0x20] sm:$0xff]
    %v110 = vld [vmem:[#allocation5 + $0x28] sm:$0xff]
    %v111 = vld [vmem:[#allocation5 + $0x30] sm:$0xff]
    %v112 = vld [vmem:[#allocation5 + $0x38] sm:$0xff]
    %v113 = vld [vmem:[%s4] sm:$0x3]
    %v115 = vlaneseq
    %v116 = vshrl.u32 %v115, 7
    %v117 = vsub.s32 0, %v116
    %v118 = vrot.slane %v113, %v117
    %v119 = vlaneseq
    %v120 = vshrl.u32 %v119, 7
    %v121 = vsub.s32 1, %v120
    %v122 = vrot.slane %v113, %v121
    %v133 = vunpack.c.l.b16 %v105
    %v134 = vunpack.c.h.b16 %v105
    %v135 = vunpack.c.l.b16 %v106
    %v136 = vunpack.c.h.b16 %v106
    %v137 = vunpack.c.l.b16 %v107
    %v138 = vunpack.c.h.b16 %v107
    %v139 = vunpack.c.l.b16 %v108
    %v140 = vunpack.c.h.b16 %v108
    %v141 = vunpack.c.l.b16 %v109
    %v142 = vunpack.c.h.b16 %v109
    %v143 = vunpack.c.l.b16 %v110
    %v144 = vunpack.c.h.b16 %v110
    %v145 = vunpack.c.l.b16 %v111
    %v146 = vunpack.c.h.b16 %v111
    %v147 = vunpack.c.l.b16 %v112
    %v148 = vunpack.c.h.b16 %v112
    %v149 = vpack.c.b16 %v135, %v133
    %v150 = vpack.c.b16 %v136, %v134
    %v151 = vpack.c.b16 %v139, %v137
    %v152 = vpack.c.b16 %v140, %v138
    %v153 = vpack.c.b16 %v143, %v141
    %v154 = vpack.c.b16 %v144, %v142
    %v155 = vpack.c.b16 %v147, %v145
    %v156 = vpack.c.b16 %v148, %v146
    %v166 = vsel %vm58, %v104, 0
    %168 = vmatprep.subr.bf16.mxu0 %v150
    %169 = vmatpush1.bf16.msra.mxu0 %v149
    %170 = vmatprep.subr.bf16.mxu0 %v152
    %171 = vmatpush1.bf16.msra.mxu0 %v151
    %172 = vmatprep.subr.bf16.mxu0 %v154
    %173 = vmatpush1.bf16.msra.mxu0 %v153
    %174 = vmatprep.subr.bf16.mxu0 %v156
    %175 = vmatpush1.bf16.msra.mxu0 %v155
    %176 = vmatprep.subr.bf16.mxu0 0
    %177 = vmatpush1.bf16.msra.mxu0 0
    %178 = vmatprep.subr.bf16.mxu0 0
    %179 = vmatpush1.bf16.msra.mxu0 0
    %180 = vmatprep.subr.bf16.mxu0 0
    %181 = vmatpush1.bf16.msra.mxu0 0
    %182 = vmatprep.subr.bf16.mxu0 0
    %183 = vmatpush1.bf16.msra.mxu0 0
    %184 = vmatprep.subr.bf16.mxu0 0
    %185 = vmatpush1.bf16.msra.mxu0 0
    %186 = vmatprep.subr.bf16.mxu0 0
    %187 = vmatpush1.bf16.msra.mxu0 0
    %188 = vmatprep.subr.bf16.mxu0 0
    %189 = vmatpush1.bf16.msra.mxu0 0
    %190 = vmatprep.subr.bf16.mxu0 0
    %191 = vmatpush1.bf16.msra.mxu0 0
    %192 = vmatprep.subr.bf16.mxu0 0
    %193 = vmatpush1.bf16.msra.mxu0 0
    %194 = vmatprep.subr.bf16.mxu0 0
    %195 = vmatpush1.bf16.msra.mxu0 0
    %196 = vmatprep.subr.bf16.mxu0 0
    %197 = vmatpush1.bf16.msra.mxu0 0
    %198 = vmatprep.subr.bf16.mxu0 0
    %199 = vmatpush1.bf16.msra.mxu0 0
    %200 = vmatprep.mubr.bf16.mxu0 0
    %201 = vmatmul.mubr.bf16.gmra.mrb[0].mxu0 %v166
    %v202 = vpop.f32.mrb[0].mxu0
    %v203 = vadd.f32 %v118, %v202
    %v204 = vpop.f32.mrb[0].mxu0
    %v205 = vadd.f32 %v122, %v204
    %v206 = vpop.f32.mrb[0].mxu0
    %v207 = vadd.f32 %v118, %v206
    %v208 = vpop.f32.mrb[0].mxu0
    %v209 = vadd.f32 %v122, %v208
    %210 = vdwg.mxu0
    %v211 = vmax.f32 %v203, 0.0
    %v212 = vmax.f32 %v207, 0.0
    %v213 = vxor.u32 %v205, 2147483648
    %v214 = vxor.u32 %v209, 2147483648
    %v215 = vmul.f32 %v213, 1.442695
    %v216 = vpow.pop %v215
    %v217 = vmul.f32 %v214, 1.442695
    %v218 = vpow.pop %v217
    %v219 = vadd.f32 %v216, 1.0
    %v220 = vadd.f32 %v218, 1.0
    %v221 = vrcp.pop %v219
    %v222 = vmul.f32 1.0, %v221
    %v223 = vrcp.pop %v220
    %v224 = vmul.f32 1.0, %v223
    %v225 = vmul.f32 %v211, %v222
    %v226 = vmul.f32 %v212, %v224
    %v227 = vld [vmem:[%s5] sm:$0x1]
    %v229 = vlaneseq
    %v230 = vshrl.u32 %v229, 7
    %v231 = vsub.s32 0, %v230
    %v232 = vrot.slane %v227, %v231
    %v234 = vmul.f32 %v225, %v232
    %v235 = vmul.f32 %v226, %v232
    %236 = vadd.xlane.f32.xlu0 %v234
    %v237 = vpop.xlane.xlu0 %236
    %238 = vadd.xlane.f32.xlu0 %v235
    %v239 = vpop.xlane.xlu0 %238
    %s240 = sld [smem:[#allocation2]]
    %v241 = vstv %s240
    %v242 = vadd.f32 %v237, %v241
    %v243 = vadd.f32 %v239, %v241
    %vm244 = vcmask 7168
    %245 = vst.msk [vmem:[%s7] sm:$0xff] %vm244, %v242
    %246 = vst.msk [vmem:[%s7 + $0x8] sm:$0xff] %vm244, %v243
    // Predicated region
    $region38: #{tpu_custom_call.1} parent=1 // pred_check
      _
    $region39: #{tpu_custom_call.1} parent=1 // pred_check_branch
      %248 = sbr.rel (0) target = $region41
    $region40: #{tpu_custom_call.1} parent=1 // pred_region
      _
    $region41: #{tpu_custom_call.1} parent=1 // pred_fallthru
      _
    // Predicated region
    $region42: #{tpu_custom_call.1} parent=1 // pred_check
      _
    $region43: #{tpu_custom_call.1} parent=1 // pred_check_branch
      %250 = sbr.rel (0) target = $region45
    $region44: #{tpu_custom_call.1} parent=1 // pred_region
      _
    $region45: #{tpu_custom_call.1} parent=1 // pred_fallthru
      _
    %251 = vsyncpa [#allocation4], 1
    %252 = vsyncpa [#allocation6], 1

</llo_original>
